<compile_context>
chip_gen: v6e
topology: v6e:2x2x1
jax: 0.10.0
libtpu: 0.0.40
codegen_flags: <defaults>
</compile_context>

<pallas_src>
import functools

import jax
import jax.numpy as jnp
from jax.experimental import pallas as pl
from jax.experimental.pallas import tpu as pltpu


def _round_up(n, m):
    return (n + m - 1) // m * m


# ----------------------------------------------------------------------------- kernel
def _policy_kernel(x_ref, p_ref, act_ref, *, activation, obs, r_b1, r_w2, r_b2, pad):
    """One batch tile: two MXU matmuls + activation + argmax over logits.

    p_ref is a single packed (rows, pad) f32 buffer:
      rows [0, obs)         : W1  (obs, pad)   (hidden cols zero-padded)
      row   r_b1            : b1  (1, pad)
      rows [r_w2, r_w2+pad) : W2  (pad, pad)   (padded rows/cols are zero)
      row   r_b2            : b2  (1, pad)     (-inf in padded action lanes)
    """
    x = x_ref[...]                                   # (TB, obs) f32

    w1 = p_ref[0:obs, :]                             # (obs, pad)
    b1 = p_ref[r_b1:r_b1 + 1, :]                     # (1, pad)
    w2 = p_ref[r_w2:r_w2 + pad, :]                   # (pad, pad)
    b2 = p_ref[r_b2:r_b2 + 1, :]                     # (1, pad)

    # ---- Linear 1 + activation ----------------------------------------------
    h = jnp.dot(x, w1, preferred_element_type=jnp.float32) + b1
    if activation == "ReLU":
        h = jnp.maximum(h, 0.0)
    elif activation == "Tanh":
        h = jnp.tanh(h)
    elif activation == "Sigmoid":
        h = 1.0 / (1.0 + jnp.exp(-h))
    else:
        raise ValueError(f"unsupported activation: {activation}")

    # ---- Linear 2 -------------------------------------------------------------
    logits = jnp.dot(h, w2, preferred_element_type=jnp.float32) + b2   # (TB, pad)

    # ---- argmax over action lanes ---------------------------------------------
    # softmax dropped: it is monotonic, so argmax(probs) == argmax(logits).
    # First-maximal-index tie-break matches torch.argmax.
    idx = jax.lax.broadcasted_iota(jnp.int32, logits.shape, 1)
    lmax = jnp.max(logits, axis=-1, keepdims=True)
    masked = jnp.where(logits == lmax, idx, pad)
    act_ref[...] = jnp.min(masked, axis=-1, keepdims=True).astype(jnp.int32)


# ----------------------------------------------------------------------------- params
def init_params(key, observation_space, hidden_nodes, action_space):
    """PyTorch-Linear-style init: U(-1/sqrt(fan_in), 1/sqrt(fan_in)).
    Weights stored as (in_features, out_features)."""
    k1, k2, k3, k4 = jax.random.split(key, 4)
    lim1 = 1.0 / jnp.sqrt(observation_space)
    lim2 = 1.0 / jnp.sqrt(hidden_nodes)
    w1 = jax.random.uniform(k1, (observation_space, hidden_nodes), jnp.float32, -lim1, lim1)
    b1 = jax.random.uniform(k2, (hidden_nodes,), jnp.float32, -lim1, lim1)
    w2 = jax.random.uniform(k3, (hidden_nodes, action_space), jnp.float32, -lim2, lim2)
    b2 = jax.random.uniform(k4, (action_space,), jnp.float32, -lim2, lim2)
    return w1, b1, w2, b2


def pack_params(w1, b1, w2, b2):
    """Pack all params into one lane-dense (rows, P) f32 buffer (one DMA operand).

    P = 128-padded max(hidden, action).  Section starts are 8-row aligned so
    in-kernel static slices are sublane-aligned.
    """
    obs, hidden = w1.shape
    hidden2, action = w2.shape
    assert hidden2 == hidden
    pad = _round_up(max(hidden, action), 128)

    r_b1 = _round_up(obs, 8)        # b1 row (8-aligned)
    r_w2 = r_b1 + 8                 # W2 section start
    r_b2 = r_w2 + pad               # b2 row
    rows = r_b2 + 8

    buf = jnp.zeros((rows, pad), jnp.float32)
    buf = buf.at[:obs, :hidden].set(w1.astype(jnp.float32))
    buf = buf.at[r_b1, :hidden].set(b1.astype(jnp.float32))
    buf = buf.at[r_w2:r_w2 + hidden, :action].set(w2.astype(jnp.float32))
    # padded action lanes get -inf bias so they can never win the argmax
    b2_row = jnp.full((pad,), -jnp.inf, jnp.float32).at[:action].set(b2.astype(jnp.float32))
    buf = buf.at[r_b2, :].set(b2_row)

    meta = dict(obs=obs, r_b1=r_b1, r_w2=r_w2, r_b2=r_b2, pad=pad, rows=rows)
    return buf, meta


# ----------------------------------------------------------------------------- wrapper
def discrete_policy_forward(x, packed, meta, activation="ReLU", block_b=128):
    """x: (OBS,) or (B, OBS) f32.  Returns int32 action(s), kept on device.

    Per the perf review, callers should keep the returned array on-device and
    only convert to a Python int when a host decision is actually needed.
    """
    squeeze = (x.ndim == 1)
    x2 = (x.reshape(1, -1) if squeeze else x).astype(jnp.float32)
    B, obs = x2.shape
    assert obs == meta["obs"]

    # batch tile: lane-/sublane-friendly, and B-divisible
    if B % block_b == 0:
        tb = block_b
    elif B % 8 == 0:
        tb = 8
    else:
        tb = B  # whole-array block (legal: equals full array dim)
    grid = (B // tb,)

    kernel = functools.partial(
        _policy_kernel,
        activation=activation,
        obs=meta["obs"], r_b1=meta["r_b1"], r_w2=meta["r_w2"],
        r_b2=meta["r_b2"], pad=meta["pad"],
    )

    out = pl.pallas_call(
        kernel,
        out_shape=jax.ShapeDtypeStruct((B, 1), jnp.int32),
        grid=grid,
        in_specs=[
            pl.BlockSpec((tb, obs), lambda i: (i, 0)),                      # x tile
            pl.BlockSpec((meta["rows"], meta["pad"]), lambda i: (0, 0)),    # params, VMEM-resident
        ],
        out_specs=pl.BlockSpec((tb, 1), lambda i: (i, 0)),
        compiler_params=pltpu.CompilerParams(
            dimension_semantics=("parallel",),       # v7x: shard batch across both TCs
        ),
    )(x2, packed)

    actions = out[:, 0]
    return actions[0] if squeeze else actions


# ----------------------------------------------------------------------------- reference
def _reference_forward(x, params, activation="ReLU"):
    w1, b1, w2, b2 = params
    h = x @ w1 + b1
    if activation == "ReLU":
        h = jnp.maximum(h, 0.0)
    elif activation == "Tanh":
        h = jnp.tanh(h)
    else:
        h = jax.nn.sigmoid(h)
    logits = h @ w2 + b2
    probs = jax.nn.softmax(logits, axis=-1)
    return jnp.argmax(probs, axis=-1).astype(jnp.int32)


# ----------------------------------------------------------------------------- main
if __name__ == "__main__":
    config = {
        "seed": 0,
        "observation_space": 16,
        "hidden_nodes": 32,
        "action_space": 8,
        "fc1_activation_func": "ReLU",
    }

    key = jax.random.PRNGKey(config["seed"])
    kp, kx = jax.random.split(key)
    params = init_params(
        kp, config["observation_space"], config["hidden_nodes"], config["action_space"]
    )
    packed, meta = pack_params(*params)

    # Batched observations (amortizes pallas_call / DMA overhead; grid=(2,)).
    B = 256
    xb = jax.random.normal(kx, (B, config["observation_space"]), dtype=jnp.float32)

    actions = discrete_policy_forward(
        xb, packed, meta, activation=config["fc1_activation_func"]
    )
    actions = jax.block_until_ready(actions)

    ref = _reference_forward(xb, params, activation=config["fc1_activation_func"])
    assert actions.shape == (B,)
    assert bool(jnp.all(actions == ref)), "batched kernel/ref mismatch"

    # Single-observation path matching the original module's forward(x) exactly.
    x1 = xb[0]
    a1 = discrete_policy_forward(x1, packed, meta, activation=config["fc1_activation_func"])
    a1 = jax.block_until_ready(a1)
    assert int(a1) == int(ref[0]), f"mismatch: kernel={int(a1)} ref={int(ref[0])}"
    # `action.item()` equivalent — done ONCE outside any hot loop (no per-step
    # device->host sync).
    _ = int(a1)

    print("KERNEL_OK")
</pallas_src>

<mosaic_0001>
module attributes {stable_mosaic.version = 11 : i64} {
  func.func @_policy_kernel(%arg0: i32, %arg1: memref<128x16xf32, #tpu.memory_space<vmem>>, %arg2: memref<160x128xf32, #tpu.memory_space<vmem>>, %arg3: memref<128x1xi32, #tpu.memory_space<vmem>>) attributes {dimension_semantics = [#tpu.dimension_semantics<parallel>], iteration_bounds = array<i64: 2>, scalar_prefetch = 0 : i64, scratch_operands = 0 : i64, tpu.core_type = #tpu.core_type<tc>, window_params = [{transform_indices = @transform_0, window_bounds = array<i64: 128, 16>}, {pipeline_mode = #tpu.pipeline_mode<synchronous>, transform_indices = @transform_1, window_bounds = array<i64: 160, 128>}, {transform_indices = @transform_2, window_bounds = array<i64: 128, 1>}]} {
    %c0 = arith.constant 0 : index
    %c0_0 = arith.constant 0 : index
    %0 = vector.load %arg1[%c0, %c0_0] : memref<128x16xf32, #tpu.memory_space<vmem>>, vector<128x16xf32>
    %c0_1 = arith.constant 0 : index
    %c0_2 = arith.constant 0 : index
    %1 = vector.load %arg2[%c0_1, %c0_2] : memref<160x128xf32, #tpu.memory_space<vmem>>, vector<16x128xf32>
    %c16 = arith.constant 16 : index
    %c0_3 = arith.constant 0 : index
    %2 = vector.load %arg2[%c16, %c0_3] : memref<160x128xf32, #tpu.memory_space<vmem>>, vector<1x128xf32>
    %c24 = arith.constant 24 : index
    %c0_4 = arith.constant 0 : index
    %3 = vector.load %arg2[%c24, %c0_4] : memref<160x128xf32, #tpu.memory_space<vmem>>, vector<128x128xf32>
    %c152 = arith.constant 152 : index
    %c0_5 = arith.constant 0 : index
    %4 = vector.load %arg2[%c152, %c0_5] : memref<160x128xf32, #tpu.memory_space<vmem>>, vector<1x128xf32>
    %cst = arith.constant dense<0.000000e+00> : vector<128x128xf32>
    %5 = tpu.matmul %0, %1, %cst {dimension_numbers = #tpu.dot_dimension_numbers<[1], [0], [0], [1], [0, 0, 1, 1], [], []>} : vector<128x16xf32>, vector<16x128xf32>, vector<128x128xf32> -> vector<128x128xf32>
    %6 = vector.broadcast %2 : vector<1x128xf32> to vector<128x128xf32>
    %7 = arith.addf %5, %6 : vector<128x128xf32>
    %cst_6 = arith.constant 0.000000e+00 : f32
    %8 = vector.broadcast %cst_6 : f32 to vector<128x128xf32>
    %9 = arith.maximumf %7, %8 : vector<128x128xf32>
    %cst_7 = arith.constant dense<0.000000e+00> : vector<128x128xf32>
    %10 = tpu.matmul %9, %3, %cst_7 {dimension_numbers = #tpu.dot_dimension_numbers<[1], [0], [0], [1], [0, 0, 1, 1], [], []>} : vector<128x128xf32>, vector<128x128xf32>, vector<128x128xf32> -> vector<128x128xf32>
    %11 = vector.broadcast %4 : vector<1x128xf32> to vector<128x128xf32>
    %12 = arith.addf %10, %11 : vector<128x128xf32>
    %13 = tpu.iota {dimensions = array<i32: 1>} : vector<128x128xi32>
    %cst_8 = arith.constant dense<0xFF800000> : vector<128xf32>
    %14 = vector.multi_reduction <maximumf>, %12, %cst_8 [1] : vector<128x128xf32> to vector<128xf32>
    %15 = vector.shape_cast %14 : vector<128xf32> to vector<128x1xf32>
    %16 = vector.broadcast %15 : vector<128x1xf32> to vector<128x128xf32>
    %17 = arith.cmpf oeq, %12, %16 : vector<128x128xf32>
    %c128_i32 = arith.constant 128 : i32
    %18 = vector.broadcast %c128_i32 : i32 to vector<128x128xi32>
    %19 = arith.select %17, %13, %18 : vector<128x128xi1>, vector<128x128xi32>
    %cst_9 = arith.constant dense<2147483647> : vector<128xi32>
    %20 = vector.multi_reduction <minsi>, %19, %cst_9 [1] : vector<128x128xi32> to vector<128xi32>
    %21 = vector.shape_cast %20 : vector<128xi32> to vector<128x1xi32>
    %c0_10 = arith.constant 0 : index
    %c0_11 = arith.constant 0 : index
    %22 = vector.load %arg3[%c0_10, %c0_11] : memref<128x1xi32, #tpu.memory_space<vmem>>, vector<128x1xi32>
    tpu.vector_store %arg3[%c0_10, %c0_11], %21 {strides = array<i32>} : memref<128x1xi32, #tpu.memory_space<vmem>>, vector<128x1xi32>,
    return
  }
  func.func @transform_0(%arg0: i32) -> (i32, i32) {
    %c0_i32 = arith.constant 0 : i32
    %c0_i32_0 = arith.constant 0 : i32
    return %arg0, %c0_i32 : i32, i32
  }
  func.func @transform_1(%arg0: i32) -> (i32, i32) {
    %c0_i32 = arith.constant 0 : i32
    %c0_i32_0 = arith.constant 0 : i32
    %c0_i32_1 = arith.constant 0 : i32
    return %c0_i32, %c0_i32_0 : i32, i32
  }
  func.func @transform_2(%arg0: i32) -> (i32, i32) {
    %c0_i32 = arith.constant 0 : i32
    %c0_i32_0 = arith.constant 0 : i32
    return %arg0, %c0_i32 : i32, i32
  }
}

</mosaic_0001>

<llo_original>
// kernel: tpu_custom_call.1
$region0: #{tpu_custom_call.1}
  #allocation0 [shape = 'u32[]', space=smem, size = 0x4, offset = 0x4, fixed_abs, tag = 'smem constant byte address 0x4 - core index']
  #allocation1 [shape = 'u32[144,128]{1,0:T(1,128)}', space=vmem, size = 0x12000, scoped, tag = 'internal scratch']
  %s0 = inlined_call_operand.vmem [shape: f32[256,16], index: 0, kind: input, shape index: {}]
  %s1 = inlined_call_operand.vmem [shape: f32[160,128], index: 1, kind: input, shape index: {}]
  %s2 = inlined_call_operand.vmem [shape: s32[256,1], index: 2, kind: output, shape index: {}]
  %s3 = sld [smem:[#allocation0]]
  $region41: #{tpu_custom_call.1} parent=0
    _
  %s5 = ssub.s32 1, %s3
  %s6 = scalar_select 0, %s5, %s3
  loop: start=0, step=1, limit=4
  $region2: #{tpu_custom_call.1} parent=0 // loop_pre_header
    _
  $region3: #{tpu_custom_call.1} parent=0 // loop_header
    %s8 = sphi 0, %s12
    %p9 = scmp.ge.s32.totalorder %s8, 4
    %s18 = sphi 0, %s20
    %s21 = sphi 0, %s18
    %s22 = sphi 0, %s21
    %s38 = sphi 0, %s22
    %s42 = sphi 0, %s42
    %s44 = sphi 0, %s42
    %s45 = sphi 0, %s44
    %s59 = sphi 0, %s45
    %s65 = sphi 0, %s67
    %s68 = sphi 0, %s65
    %s69 = sphi 0, %s68
    %s85 = sphi 0, %s69
  $region4: #{tpu_custom_call.1} parent=0 // loop_header_branch
    %11 = sbr.rel (%p9) target = $region8
  $region5: #{tpu_custom_call.1} parent=0 // loop_body
    %s13 = ssub.s32 %s8, 1
    %s14 = ssub.s32 %s8, 2
    %s15 = sadd.s32 %s8, 1
    %s16 = ssub.s32 %s8, %s15
    %p17 = scmp.eq.s32.totalorder %s16, 0
    %s19 = sadd.s32 %s18, 1
    %s20 = scalar_select %p17, %s18, %s19
    %p23 = pneg %p17
    %p24 = scmp.eq.s32.totalorder %s8, 1
    %p25 = por %p23, %p24
    %p26 = scmp.ne.s32.totalorder %s18, %s21
    %p27 = scmp.eq.s32.totalorder %s8, 0
    %p28 = por %p26, %p27
    %p29 = scmp.ne.s32.totalorder %s18, %s21
    %p30 = scmp.eq.s32.totalorder %s13, 1
    %p31 = por %p29, %p30
    %p32 = scmp.ne.s32.totalorder %s21, %s22
    %p33 = scmp.eq.s32.totalorder %s13, 0
    %p34 = por %p32, %p33
    %p35 = scmp.ne.s32.totalorder %s21, %s22
    %p36 = scmp.eq.s32.totalorder %s14, 1
    %p37 = por %p35, %p36
    %p39 = scmp.ne.s32.totalorder %s22, %s38
    %p40 = scmp.eq.s32.totalorder %s14, 0
    %p41 = por %p39, %p40
    %s43 = sadd.s32 %s42, 1
    %p46 = scmp.eq.s32.totalorder %s8, 1
    %p47 = scmp.ne.s32.totalorder %s42, %s44
    %p48 = scmp.eq.s32.totalorder %s8, 0
    %p49 = por %p47, %p48
    %p50 = scmp.ne.s32.totalorder %s42, %s44
    %p51 = scmp.eq.s32.totalorder %s13, 1
    %p52 = por %p50, %p51
    %p53 = scmp.ne.s32.totalorder %s44, %s45
    %p54 = scmp.eq.s32.totalorder %s13, 0
    %p55 = por %p53, %p54
    %p56 = scmp.ne.s32.totalorder %s44, %s45
    %p57 = scmp.eq.s32.totalorder %s14, 1
    %p58 = por %p56, %p57
    %p60 = scmp.ne.s32.totalorder %s45, %s59
    %p61 = scmp.eq.s32.totalorder %s14, 0
    %p62 = por %p60, %p61
    %s63 = ssub.s32 %s8, %s15
    %p64 = scmp.eq.s32.totalorder %s63, 0
    %s66 = sadd.s32 %s65, 1
    %s67 = scalar_select %p64, %s65, %s66
    %p70 = pneg %p64
    %p71 = scmp.eq.s32.totalorder %s8, 1
    %p72 = por %p70, %p71
    %p73 = scmp.ne.s32.totalorder %s65, %s68
    %p74 = scmp.eq.s32.totalorder %s8, 0
    %p75 = por %p73, %p74
    %p76 = scmp.ne.s32.totalorder %s65, %s68
    %p77 = scmp.eq.s32.totalorder %s13, 1
    %p78 = por %p76, %p77
    %p79 = scmp.ne.s32.totalorder %s68, %s69
    %p80 = scmp.eq.s32.totalorder %s13, 0
    %p81 = por %p79, %p80
    %p82 = scmp.ne.s32.totalorder %s68, %s69
    %p83 = scmp.eq.s32.totalorder %s14, 1
    %p84 = por %p82, %p83
    %p86 = scmp.ne.s32.totalorder %s69, %s85
    %p87 = scmp.eq.s32.totalorder %s14, 0
    %p88 = por %p86, %p87
    %p89 = scmp.le.s32.totalorder 1, %s8
    %p90 = scmp.lt.s32.totalorder %s8, 3
    %p91 = pnand %p89, %p90
    %p92 = pneg %p91
    // Predicated region
    $region9: #{tpu_custom_call.1} parent=5 // pred_check
      _
    $region10: #{tpu_custom_call.1} parent=5 // pred_check_branch
      %94 = sbr.rel (%p91) target = $region12
    $region11: #{tpu_custom_call.1} parent=5 // pred_region
      %s95 = ssub.s32 %s8, 1
      // Predicated region
      $region13: #{tpu_custom_call.1} parent=11 // pred_check
        %p96 = pneg %p55
      $region14: #{tpu_custom_call.1} parent=11 // pred_check_branch
        %98 = sbr.rel (%p96) target = $region16
      $region15: #{tpu_custom_call.1} parent=11 // pred_region
        _
      $region16: #{tpu_custom_call.1} parent=11 // pred_fallthru
        _
    $region12: #{tpu_custom_call.1} parent=5 // pred_fallthru
      _
    %p99 = scmp.lt.s32.totalorder %s8, 2
    // Predicated region
    $region17: #{tpu_custom_call.1} parent=5 // pred_check
      %p100 = pneg %p99
    $region18: #{tpu_custom_call.1} parent=5 // pred_check_branch
      %102 = sbr.rel (%p100) target = $region20
    $region19: #{tpu_custom_call.1} parent=5 // pred_region
      // Predicated region
      $region21: #{tpu_custom_call.1} parent=19 // pred_check
        %p103 = pneg %p28
      $region22: #{tpu_custom_call.1} parent=19 // pred_check_branch
        %105 = sbr.rel (%p103) target = $region24
      $region23: #{tpu_custom_call.1} parent=19 // pred_region
        %s106 = smul.u32 16, %s8
        %p107 = scmp.lt.s32.totalorder %s106, 31
        %s108 = scalar_select %p107, %s106, 31
        %s109 = smul.addr %s108, 8
        %s110 = scalar_lea.vmem %s0, %s109
        %s111 = smul.u32 16, %s8
      $region24: #{tpu_custom_call.1} parent=19 // pred_fallthru
        _
    $region20: #{tpu_custom_call.1} parent=5 // pred_fallthru
      _
    %p112 = scmp.le.s32.totalorder 1, %s8
    %p113 = scmp.lt.s32.totalorder %s8, 3
    %p114 = pnand %p112, %p113
    %p115 = pneg %p114
    // Predicated region
    $region25: #{tpu_custom_call.1} parent=5 // pred_check
      _
    $region26: #{tpu_custom_call.1} parent=5 // pred_check_branch
      %117 = sbr.rel (%p114) target = $region28
    $region27: #{tpu_custom_call.1} parent=5 // pred_region
      %s118 = ssub.s32 %s8, 1
      %s119 = smul.u32 16, %s13
      %p120 = scmp.lt.s32.totalorder %s119, 31
      %s121 = scalar_select %p120, %s119, 31
      %s122 = smul.addr %s121, 8
      %s123 = scalar_lea.vmem %s0, %s122
      %p124 = pneg %p34
      %p125 = pneg %p31
      %p126 = pneg %p55
      %p127 = pneg %p52
      %p128 = pneg %p81
      %p129 = pneg %p78
      %s130 = smul.u32 16, %s13
      %p131 = scmp.lt.s32.totalorder %s130, 31
      %s132 = scalar_select %p131, %s130, 31
      %s133 = smul.addr %s132, 8
      %s134 = scalar_lea.vmem %s2, %s133
      %s135 = smul.u32 16, %s13
      %p136 = scmp.lt.s32.totalorder %s135, 31
      %s137 = scalar_select %p136, %s135, 31
      %s138 = smul.addr %s137, 8
      %s139 = scalar_lea.vmem %s0, %s138
      %s140 = smul.u32 16, %s13
      %s141 = smul.u32 16, %s13
      %p142 = scmp.lt.s32.totalorder %s141, 31
      %s143 = scalar_select %p142, %s141, 31
      %s144 = smul.addr %s143, 8
      %s145 = scalar_lea.vmem %s2, %s144
      %s146 = smul.u32 16, %s13
      %v147 = vld [vmem:[%s139] sm:$0xff]
      %v148 = vld [vmem:[%s139 + $0x8] sm:$0xff]
      %v149 = vld [vmem:[%s139 + $0x10] sm:$0xff]
      %v150 = vld [vmem:[%s139 + $0x18] sm:$0xff]
      %v151 = vld [vmem:[%s139 + $0x20] sm:$0xff]
      %v152 = vld [vmem:[%s139 + $0x28] sm:$0xff]
      %v153 = vld [vmem:[%s139 + $0x30] sm:$0xff]
      %v154 = vld [vmem:[%s139 + $0x38] sm:$0xff]
      %v155 = vld [vmem:[%s139 + $0x40] sm:$0xff]
      %v156 = vld [vmem:[%s139 + $0x48] sm:$0xff]
      %v157 = vld [vmem:[%s139 + $0x50] sm:$0xff]
      %v158 = vld [vmem:[%s139 + $0x58] sm:$0xff]
      %v159 = vld [vmem:[%s139 + $0x60] sm:$0xff]
      %v160 = vld [vmem:[%s139 + $0x68] sm:$0xff]
      %v161 = vld [vmem:[%s139 + $0x70] sm:$0xff]
      %v162 = vld [vmem:[%s139 + $0x78] sm:$0xff]
      %v163 = vld [vmem:[%s1] sm:$0xff]
      %v164 = vld [vmem:[%s1 + $0x8] sm:$0xff]
      %v165 = vld [vmem:[%s1 + $0x10] sm:$0x1]
      %v166 = vld [vmem:[%s1 + $0x18] sm:$0xff]
      %v167 = vld [vmem:[%s1 + $0x20] sm:$0xff]
      %v168 = vld [vmem:[%s1 + $0x28] sm:$0xff]
      %v169 = vld [vmem:[%s1 + $0x30] sm:$0xff]
      %v170 = vld [vmem:[%s1 + $0x38] sm:$0xff]
      %v171 = vld [vmem:[%s1 + $0x40] sm:$0xff]
      %v172 = vld [vmem:[%s1 + $0x48] sm:$0xff]
      %v173 = vld [vmem:[%s1 + $0x50] sm:$0xff]
      %v174 = vld [vmem:[%s1 + $0x58] sm:$0xff]
      %v175 = vld [vmem:[%s1 + $0x60] sm:$0xff]
      %v176 = vld [vmem:[%s1 + $0x68] sm:$0xff]
      %v177 = vld [vmem:[%s1 + $0x70] sm:$0xff]
      %v178 = vld [vmem:[%s1 + $0x78] sm:$0xff]
      %v179 = vld [vmem:[%s1 + $0x80] sm:$0xff]
      %v180 = vld [vmem:[%s1 + $0x88] sm:$0xff]
      %v181 = vld [vmem:[%s1 + $0x90] sm:$0xff]
      %v182 = vld [vmem:[%s1 + $0x98] sm:$0x1]
      %v183 = vlaneseq
      %v184 = vshrl.u32 %v183, 7
      %v185 = vsub.s32 0, %v184
      %v186 = vrot.slane %v165, %v185
      %vm187 = vcmask 130048
      %v189 = vsel %vm187, %v147, 0
      %v192 = vsel %vm187, %v148, 0
      %v195 = vsel %vm187, %v149, 0
      %v198 = vsel %vm187, %v150, 0
      %v201 = vsel %vm187, %v151, 0
      %v204 = vsel %vm187, %v152, 0
      %v207 = vsel %vm187, %v153, 0
      %v210 = vsel %vm187, %v154, 0
      %v213 = vsel %vm187, %v155, 0
      %v216 = vsel %vm187, %v156, 0
      %v219 = vsel %vm187, %v157, 0
      %v222 = vsel %vm187, %v158, 0
      %v225 = vsel %vm187, %v159, 0
      %v228 = vsel %vm187, %v160, 0
      %v231 = vsel %vm187, %v161, 0
      %v234 = vsel %vm187, %v162, 0
      %236 = vmatprep.subr.mxu0 0.0
      %237 = vmatpush1.msra.mxu0 0.0
      %238 = vmatprep.subr.mxu0 0.0
      %239 = vmatpush1.msra.mxu0 0.0
      %240 = vmatprep.subr.mxu0 0.0
      %241 = vmatpush1.msra.mxu0 0.0
      %242 = vmatprep.subr.mxu0 0.0
      %243 = vmatpush1.msra.mxu0 0.0
      %244 = vmatprep.subr.mxu0 0.0
      %245 = vmatpush1.msra.mxu0 0.0
      %246 = vmatprep.subr.mxu0 0.0
      %247 = vmatpush1.msra.mxu0 0.0
      %248 = vmatprep.subr.mxu0 0.0
      %249 = vmatpush1.msra.mxu0 0.0
      %250 = vmatprep.subr.mxu0 0.0
      %251 = vmatpush1.msra.mxu0 0.0
      %252 = vmatprep.subr.mxu0 0.0
      %253 = vmatpush1.msra.mxu0 0.0
      %254 = vmatprep.subr.mxu0 0.0
      %255 = vmatpush1.msra.mxu0 0.0
      %256 = vmatprep.subr.mxu0 0.0
      %257 = vmatpush1.msra.mxu0 0.0
      %258 = vmatprep.subr.mxu0 0.0
      %259 = vmatpush1.msra.mxu0 0.0
      %260 = vmatprep.subr.mxu0 0.0
      %261 = vmatpush1.msra.mxu0 0.0
      %262 = vmatprep.subr.mxu0 0.0
      %263 = vmatpush1.msra.mxu0 0.0
      %264 = vmatprep.subr.mxu0 0.0
      %265 = vmatpush1.msra.mxu0 %v164
      %266 = vmatprep.subr.mxu0 0.0
      %267 = vmatpush1.msra.mxu0 %v163
      %268 = vmatprep.subr.mxu0 0.0
      %269 = vmatpush2.msra.mxu0 0.0
      %270 = vmatprep.subr.mxu0 0.0
      %271 = vmatpush2.msra.mxu0 0.0
      %272 = vmatprep.subr.mxu0 0.0
      %273 = vmatpush2.msra.mxu0 0.0
      %274 = vmatprep.subr.mxu0 0.0
      %275 = vmatpush2.msra.mxu0 0.0
      %276 = vmatprep.subr.mxu0 0.0
      %277 = vmatpush2.msra.mxu0 0.0
      %278 = vmatprep.subr.mxu0 0.0
      %279 = vmatpush2.msra.mxu0 0.0
      %280 = vmatprep.subr.mxu0 0.0
      %281 = vmatpush2.msra.mxu0 0.0
      %282 = vmatprep.subr.mxu0 0.0
      %283 = vmatpush2.msra.mxu0 0.0
      %284 = vmatprep.subr.mxu0 0.0
      %285 = vmatpush2.msra.mxu0 0.0
      %286 = vmatprep.subr.mxu0 0.0
      %287 = vmatpush2.msra.mxu0 0.0
      %288 = vmatprep.subr.mxu0 0.0
      %289 = vmatpush2.msra.mxu0 0.0
      %290 = vmatprep.subr.mxu0 0.0
      %291 = vmatpush2.msra.mxu0 0.0
      %292 = vmatprep.subr.mxu0 0.0
      %293 = vmatpush2.msra.mxu0 0.0
      %294 = vmatprep.subr.mxu0 0.0
      %295 = vmatpush2.msra.mxu0 0.0
      %296 = vmatprep.subr.mxu0 0.0
      %297 = vmatpush2.msra.mxu0 0.0
      %298 = vmatprep.subr.mxu0 0.0
      %299 = vmatpush2.msra.mxu0 0.0
      %300 = vmatprep.mubr.f32.mxu0 0.0
      %301 = vmatmul.mubr.f32.gmra.mxu0 %v189
      %v302 = vpop.f32.mrf.mxu0
      %v303 = vadd.f32 %v186, %v302
      %v304 = vpop.f32.mrf.mxu0
      %305 = vmatprep.mubr.f32.mxu0 0.0
      %306 = vmatmul.mubr.f32.gmra.mxu0 %v192
      %v307 = vpop.f32.mrf.mxu0
      %v308 = vadd.f32 %v186, %v307
      %v309 = vpop.f32.mrf.mxu0
      %310 = vmatprep.mubr.f32.mxu0 0.0
      %311 = vmatmul.mubr.f32.gmra.mxu0 %v195
      %v312 = vpop.f32.mrf.mxu0
      %v313 = vadd.f32 %v186, %v312
      %v314 = vpop.f32.mrf.mxu0
      %315 = vmatprep.mubr.f32.mxu0 0.0
      %316 = vmatmul.mubr.f32.gmra.mxu0 %v198
      %v317 = vpop.f32.mrf.mxu0
      %v318 = vadd.f32 %v186, %v317
      %v319 = vpop.f32.mrf.mxu0
      %320 = vmatprep.mubr.f32.mxu0 0.0
      %321 = vmatmul.mubr.f32.gmra.mxu0 %v201
      %v322 = vpop.f32.mrf.mxu0
      %v323 = vadd.f32 %v186, %v322
      %v324 = vpop.f32.mrf.mxu0
      %325 = vmatprep.mubr.f32.mxu0 0.0
      %326 = vmatmul.mubr.f32.gmra.mxu0 %v204
      %v327 = vpop.f32.mrf.mxu0
      %v328 = vadd.f32 %v186, %v327
      %v329 = vpop.f32.mrf.mxu0
      %330 = vmatprep.mubr.f32.mxu0 0.0
      %331 = vmatmul.mubr.f32.gmra.mxu0 %v207
      %v332 = vpop.f32.mrf.mxu0
      %v333 = vadd.f32 %v186, %v332
      %v334 = vpop.f32.mrf.mxu0
      %335 = vmatprep.mubr.f32.mxu0 0.0
      %336 = vmatmul.mubr.f32.gmra.mxu0 %v210
      %v337 = vpop.f32.mrf.mxu0
      %v338 = vadd.f32 %v186, %v337
      %v339 = vpop.f32.mrf.mxu0
      %340 = vmatprep.mubr.f32.mxu0 0.0
      %341 = vmatmul.mubr.f32.gmra.mxu0 %v213
      %v342 = vpop.f32.mrf.mxu0
      %v343 = vadd.f32 %v186, %v342
      %v344 = vpop.f32.mrf.mxu0
      %345 = vmatprep.mubr.f32.mxu0 0.0
      %346 = vmatmul.mubr.f32.gmra.mxu0 %v216
      %v347 = vpop.f32.mrf.mxu0
      %v348 = vadd.f32 %v186, %v347
      %v349 = vpop.f32.mrf.mxu0
      %350 = vmatprep.mubr.f32.mxu0 0.0
      %351 = vmatmul.mubr.f32.gmra.mxu0 %v219
      %v352 = vpop.f32.mrf.mxu0
      %v353 = vadd.f32 %v186, %v352
      %v354 = vpop.f32.mrf.mxu0
      %355 = vmatprep.mubr.f32.mxu0 0.0
      %356 = vmatmul.mubr.f32.gmra.mxu0 %v222
      %v357 = vpop.f32.mrf.mxu0
      %v358 = vadd.f32 %v186, %v357
      %v359 = vpop.f32.mrf.mxu0
      %360 = vmatprep.mubr.f32.mxu0 0.0
      %361 = vmatmul.mubr.f32.gmra.mxu0 %v225
      %v362 = vpop.f32.mrf.mxu0
      %v363 = vadd.f32 %v186, %v362
      %v364 = vpop.f32.mrf.mxu0
      %365 = vmatprep.mubr.f32.mxu0 0.0
      %366 = vmatmul.mubr.f32.gmra.mxu0 %v228
      %v367 = vpop.f32.mrf.mxu0
      %v368 = vadd.f32 %v186, %v367
      %v369 = vpop.f32.mrf.mxu0
      %370 = vmatprep.mubr.f32.mxu0 0.0
      %371 = vmatmul.mubr.f32.gmra.mxu0 %v231
      %v372 = vpop.f32.mrf.mxu0
      %v373 = vadd.f32 %v186, %v372
      %v374 = vpop.f32.mrf.mxu0
      %375 = vmatprep.mubr.f32.mxu0 0.0
      %376 = vmatmul.mubr.f32.gmra.mxu0 %v234
      %v377 = vpop.f32.mrf.mxu0
      %v378 = vadd.f32 %v186, %v377
      %v379 = vpop.f32.mrf.mxu0
      %380 = vdwg.mxu0
      %v381 = vmax.f32 %v303, 0.0
      %v382 = vmax.f32 %v308, 0.0
      %v383 = vmax.f32 %v313, 0.0
      %v384 = vmax.f32 %v318, 0.0
      %v385 = vmax.f32 %v323, 0.0
      %v386 = vmax.f32 %v328, 0.0
      %v387 = vmax.f32 %v333, 0.0
      %v388 = vmax.f32 %v338, 0.0
      %v389 = vmax.f32 %v343, 0.0
      %v390 = vmax.f32 %v348, 0.0
      %v391 = vmax.f32 %v353, 0.0
      %v392 = vmax.f32 %v358, 0.0
      %v393 = vmax.f32 %v363, 0.0
      %v394 = vmax.f32 %v368, 0.0
      %v395 = vmax.f32 %v373, 0.0
      %v396 = vmax.f32 %v378, 0.0
      %v397 = vlaneseq
      %v398 = vshrl.u32 %v397, 7
      %v399 = vsub.s32 0, %v398
      %v400 = vrot.slane %v182, %v399
      %401 = vmatprep.subr.mxu0 0.0
      %402 = vmatpush1.msra.mxu0 %v181
      %403 = vmatprep.subr.mxu0 0.0
      %404 = vmatpush1.msra.mxu0 %v180
      %405 = vmatprep.subr.mxu0 0.0
      %406 = vmatpush1.msra.mxu0 %v179
      %407 = vmatprep.subr.mxu0 0.0
      %408 = vmatpush1.msra.mxu0 %v178
      %409 = vmatprep.subr.mxu0 0.0
      %410 = vmatpush1.msra.mxu0 %v177
      %411 = vmatprep.subr.mxu0 0.0
      %412 = vmatpush1.msra.mxu0 %v176
      %413 = vmatprep.subr.mxu0 0.0
      %414 = vmatpush1.msra.mxu0 %v175
      %415 = vmatprep.subr.mxu0 0.0
      %416 = vmatpush1.msra.mxu0 %v174
      %417 = vmatprep.subr.mxu0 0.0
      %418 = vmatpush1.msra.mxu0 %v173
      %419 = vmatprep.subr.mxu0 0.0
      %420 = vmatpush1.msra.mxu0 %v172
      %421 = vmatprep.subr.mxu0 0.0
      %422 = vmatpush1.msra.mxu0 %v171
      %423 = vmatprep.subr.mxu0 0.0
      %424 = vmatpush1.msra.mxu0 %v170
      %425 = vmatprep.subr.mxu0 0.0
      %426 = vmatpush1.msra.mxu0 %v169
      %427 = vmatprep.subr.mxu0 0.0
      %428 = vmatpush1.msra.mxu0 %v168
      %429 = vmatprep.subr.mxu0 0.0
      %430 = vmatpush1.msra.mxu0 %v167
      %431 = vmatprep.subr.mxu0 0.0
      %432 = vmatpush1.msra.mxu0 %v166
      %433 = vmatprep.subr.mxu0 0.0
      %434 = vmatpush2.msra.mxu0 0.0
      %435 = vmatprep.subr.mxu0 0.0
      %436 = vmatpush2.msra.mxu0 0.0
      %437 = vmatprep.subr.mxu0 0.0
      %438 = vmatpush2.msra.mxu0 0.0
      %439 = vmatprep.subr.mxu0 0.0
      %440 = vmatpush2.msra.mxu0 0.0
      %441 = vmatprep.subr.mxu0 0.0
      %442 = vmatpush2.msra.mxu0 0.0
      %443 = vmatprep.subr.mxu0 0.0
      %444 = vmatpush2.msra.mxu0 0.0
      %445 = vmatprep.subr.mxu0 0.0
      %446 = vmatpush2.msra.mxu0 0.0
      %447 = vmatprep.subr.mxu0 0.0
      %448 = vmatpush2.msra.mxu0 0.0
      %449 = vmatprep.subr.mxu0 0.0
      %450 = vmatpush2.msra.mxu0 0.0
      %451 = vmatprep.subr.mxu0 0.0
      %452 = vmatpush2.msra.mxu0 0.0
      %453 = vmatprep.subr.mxu0 0.0
      %454 = vmatpush2.msra.mxu0 0.0
      %455 = vmatprep.subr.mxu0 0.0
      %456 = vmatpush2.msra.mxu0 0.0
      %457 = vmatprep.subr.mxu0 0.0
      %458 = vmatpush2.msra.mxu0 0.0
      %459 = vmatprep.subr.mxu0 0.0
      %460 = vmatpush2.msra.mxu0 0.0
      %461 = vmatprep.subr.mxu0 0.0
      %462 = vmatpush2.msra.mxu0 0.0
      %463 = vmatprep.subr.mxu0 0.0
      %464 = vmatpush2.msra.mxu0 0.0
      %465 = vmatprep.mubr.f32.mxu0 0.0
      %466 = vmatmul.mubr.f32.gmra.mxu0 %v381
      %v467 = vpop.f32.mrf.mxu0
      %v468 = vadd.f32 %v400, %v467
      %v469 = vpop.f32.mrf.mxu0
      %470 = vmatprep.mubr.f32.mxu0 0.0
      %471 = vmatmul.mubr.f32.gmra.mxu0 %v382
      %v472 = vpop.f32.mrf.mxu0
      %v473 = vadd.f32 %v400, %v472
      %v474 = vpop.f32.mrf.mxu0
      %475 = vmatprep.mubr.f32.mxu0 0.0
      %476 = vmatmul.mubr.f32.gmra.mxu0 %v383
      %v477 = vpop.f32.mrf.mxu0
      %v478 = vadd.f32 %v400, %v477
      %v479 = vpop.f32.mrf.mxu0
      %480 = vmatprep.mubr.f32.mxu0 0.0
      %481 = vmatmul.mubr.f32.gmra.mxu0 %v384
      %v482 = vpop.f32.mrf.mxu0
      %v483 = vadd.f32 %v400, %v482
      %v484 = vpop.f32.mrf.mxu0
      %485 = vmatprep.mubr.f32.mxu0 0.0
      %486 = vmatmul.mubr.f32.gmra.mxu0 %v385
      %v487 = vpop.f32.mrf.mxu0
      %v488 = vadd.f32 %v400, %v487
      %v489 = vpop.f32.mrf.mxu0
      %490 = vmatprep.mubr.f32.mxu0 0.0
      %491 = vmatmul.mubr.f32.gmra.mxu0 %v386
      %v492 = vpop.f32.mrf.mxu0
      %v493 = vadd.f32 %v400, %v492
      %v494 = vpop.f32.mrf.mxu0
      %495 = vmatprep.mubr.f32.mxu0 0.0
      %496 = vmatmul.mubr.f32.gmra.mxu0 %v387
      %v497 = vpop.f32.mrf.mxu0
      %v498 = vadd.f32 %v400, %v497
      %v499 = vpop.f32.mrf.mxu0
      %500 = vmatprep.mubr.f32.mxu0 0.0
      %501 = vmatmul.mubr.f32.gmra.mxu0 %v388
      %v502 = vpop.f32.mrf.mxu0
      %v503 = vadd.f32 %v400, %v502
      %v504 = vpop.f32.mrf.mxu0
      %505 = vmatprep.mubr.f32.mxu0 0.0
      %506 = vmatmul.mubr.f32.gmra.mxu0 %v389
      %v507 = vpop.f32.mrf.mxu0
      %v508 = vadd.f32 %v400, %v507
      %v509 = vpop.f32.mrf.mxu0
      %510 = vmatprep.mubr.f32.mxu0 0.0
      %511 = vmatmul.mubr.f32.gmra.mxu0 %v390
      %v512 = vpop.f32.mrf.mxu0
      %v513 = vadd.f32 %v400, %v512
      %v514 = vpop.f32.mrf.mxu0
      %515 = vmatprep.mubr.f32.mxu0 0.0
      %516 = vmatmul.mubr.f32.gmra.mxu0 %v391
      %v517 = vpop.f32.mrf.mxu0
      %v518 = vadd.f32 %v400, %v517
      %v519 = vpop.f32.mrf.mxu0
      %520 = vmatprep.mubr.f32.mxu0 0.0
      %521 = vmatmul.mubr.f32.gmra.mxu0 %v392
      %v522 = vpop.f32.mrf.mxu0
      %v523 = vadd.f32 %v400, %v522
      %v524 = vpop.f32.mrf.mxu0
      %525 = vmatprep.mubr.f32.mxu0 0.0
      %526 = vmatmul.mubr.f32.gmra.mxu0 %v393
      %v527 = vpop.f32.mrf.mxu0
      %v528 = vadd.f32 %v400, %v527
      %v529 = vpop.f32.mrf.mxu0
      %530 = vmatprep.mubr.f32.mxu0 0.0
      %531 = vmatmul.mubr.f32.gmra.mxu0 %v394
      %v532 = vpop.f32.mrf.mxu0
      %v533 = vadd.f32 %v400, %v532
      %v534 = vpop.f32.mrf.mxu0
      %535 = vmatprep.mubr.f32.mxu0 0.0
      %536 = vmatmul.mubr.f32.gmra.mxu0 %v395
      %v537 = vpop.f32.mrf.mxu0
      %v538 = vadd.f32 %v400, %v537
      %v539 = vpop.f32.mrf.mxu0
      %540 = vmatprep.mubr.f32.mxu0 0.0
      %541 = vmatmul.mubr.f32.gmra.mxu0 %v396
      %v542 = vpop.f32.mrf.mxu0
      %v543 = vadd.f32 %v400, %v542
      %v544 = vpop.f32.mrf.mxu0
      %545 = vdwg.mxu0
      %v546 = vlaneseq
      %v547 = vand.u32 %v546, 127
      %548 = vmax.xlane.f32.xlu0 %v468
      %v549 = vpop.xlane.xlu0 %548
      %550 = vmax.xlane.f32.xlu0 %v473
      %v551 = vpop.xlane.xlu0 %550
      %552 = vmax.xlane.f32.xlu0 %v478
      %v553 = vpop.xlane.xlu0 %552
      %554 = vmax.xlane.f32.xlu0 %v483
      %v555 = vpop.xlane.xlu0 %554
      %556 = vmax.xlane.f32.xlu0 %v488
      %v557 = vpop.xlane.xlu0 %556
      %558 = vmax.xlane.f32.xlu0 %v493
      %v559 = vpop.xlane.xlu0 %558
      %560 = vmax.xlane.f32.xlu0 %v498
      %v561 = vpop.xlane.xlu0 %560
      %562 = vmax.xlane.f32.xlu0 %v503
      %v563 = vpop.xlane.xlu0 %562
      %564 = vmax.xlane.f32.xlu0 %v508
      %v565 = vpop.xlane.xlu0 %564
      %566 = vmax.xlane.f32.xlu0 %v513
      %v567 = vpop.xlane.xlu0 %566
      %568 = vmax.xlane.f32.xlu0 %v518
      %v569 = vpop.xlane.xlu0 %568
      %570 = vmax.xlane.f32.xlu0 %v523
      %v571 = vpop.xlane.xlu0 %570
      %572 = vmax.xlane.f32.xlu0 %v528
      %v573 = vpop.xlane.xlu0 %572
      %574 = vmax.xlane.f32.xlu0 %v533
      %v575 = vpop.xlane.xlu0 %574
      %576 = vmax.xlane.f32.xlu0 %v538
      %v577 = vpop.xlane.xlu0 %576
      %578 = vmax.xlane.f32.xlu0 %v543
      %v579 = vpop.xlane.xlu0 %578
      %vm580 = vcmp.eq.f32.partialorder %v468, %v549
      %vm581 = vcmp.eq.f32.partialorder %v473, %v551
      %vm582 = vcmp.eq.f32.partialorder %v478, %v553
      %vm583 = vcmp.eq.f32.partialorder %v483, %v555
      %vm584 = vcmp.eq.f32.partialorder %v488, %v557
      %vm585 = vcmp.eq.f32.partialorder %v493, %v559
      %vm586 = vcmp.eq.f32.partialorder %v498, %v561
      %vm587 = vcmp.eq.f32.partialorder %v503, %v563
      %vm588 = vcmp.eq.f32.partialorder %v508, %v565
      %vm589 = vcmp.eq.f32.partialorder %v513, %v567
      %vm590 = vcmp.eq.f32.partialorder %v518, %v569
      %vm591 = vcmp.eq.f32.partialorder %v523, %v571
      %vm592 = vcmp.eq.f32.partialorder %v528, %v573
      %vm593 = vcmp.eq.f32.partialorder %v533, %v575
      %vm594 = vcmp.eq.f32.partialorder %v538, %v577
      %vm595 = vcmp.eq.f32.partialorder %v543, %v579
      %v596 = vsel %vm580, %v547, 128
      %v597 = vsel %vm581, %v547, 128
      %v598 = vsel %vm582, %v547, 128
      %v599 = vsel %vm583, %v547, 128
      %v600 = vsel %vm584, %v547, 128
      %v601 = vsel %vm585, %v547, 128
      %v602 = vsel %vm586, %v547, 128
      %v603 = vsel %vm587, %v547, 128
      %v604 = vsel %vm588, %v547, 128
      %v605 = vsel %vm589, %v547, 128
      %v606 = vsel %vm590, %v547, 128
      %v607 = vsel %vm591, %v547, 128
      %v608 = vsel %vm592, %v547, 128
      %v609 = vsel %vm593, %v547, 128
      %v610 = vsel %vm594, %v547, 128
      %v611 = vsel %vm595, %v547, 128
      %v612 = vand.u32 %v596, 65535
      %v613 = vshra.s32 %v596, 16
      %v614 = vcvt.s32.f32 %v612
      %v615 = vcvt.s32.f32 %v613
      %616 = vmin.xlane.f32.xlu0 %v615
      %v617 = vpop.xlane.xlu0 %616
      %vm618 = vcmp.eq.f32.partialorder %v615, %v617
      %v619 = vsel %vm618, %v614, inf
      %620 = vmin.xlane.f32.xlu0 %v619
      %v621 = vpop.xlane.xlu0 %620
      %v622 = vcvt.f32.s32 %v621
      %v623 = vcvt.f32.s32 %v617
      %v624 = vshll.u32 %v623, 16
      %v625 = vadd.s32 %v624, %v622
      %v626 = vand.u32 %v597, 65535
      %v627 = vshra.s32 %v597, 16
      %v628 = vcvt.s32.f32 %v626
      %v629 = vcvt.s32.f32 %v627
      %630 = vmin.xlane.f32.xlu0 %v629
      %v631 = vpop.xlane.xlu0 %630
      %vm632 = vcmp.eq.f32.partialorder %v629, %v631
      %v633 = vsel %vm632, %v628, inf
      %634 = vmin.xlane.f32.xlu0 %v633
      %v635 = vpop.xlane.xlu0 %634
      %v636 = vcvt.f32.s32 %v635
      %v637 = vcvt.f32.s32 %v631
      %v638 = vshll.u32 %v637, 16
      %v639 = vadd.s32 %v638, %v636
      %v640 = vand.u32 %v598, 65535
      %v641 = vshra.s32 %v598, 16
      %v642 = vcvt.s32.f32 %v640
      %v643 = vcvt.s32.f32 %v641
      %644 = vmin.xlane.f32.xlu0 %v643
      %v645 = vpop.xlane.xlu0 %644
      %vm646 = vcmp.eq.f32.partialorder %v643, %v645
      %v647 = vsel %vm646, %v642, inf
      %648 = vmin.xlane.f32.xlu0 %v647
      %v649 = vpop.xlane.xlu0 %648
      %v650 = vcvt.f32.s32 %v649
      %v651 = vcvt.f32.s32 %v645
      %v652 = vshll.u32 %v651, 16
      %v653 = vadd.s32 %v652, %v650
      %v654 = vand.u32 %v599, 65535
      %v655 = vshra.s32 %v599, 16
      %v656 = vcvt.s32.f32 %v654
      %v657 = vcvt.s32.f32 %v655
      %658 = vmin.xlane.f32.xlu0 %v657
      %v659 = vpop.xlane.xlu0 %658
      %vm660 = vcmp.eq.f32.partialorder %v657, %v659
      %v661 = vsel %vm660, %v656, inf
      %662 = vmin.xlane.f32.xlu0 %v661
      %v663 = vpop.xlane.xlu0 %662
      %v664 = vcvt.f32.s32 %v663
      %v665 = vcvt.f32.s32 %v659
      %v666 = vshll.u32 %v665, 16
      %v667 = vadd.s32 %v666, %v664
      %v668 = vand.u32 %v600, 65535
      %v669 = vshra.s32 %v600, 16
      %v670 = vcvt.s32.f32 %v668
      %v671 = vcvt.s32.f32 %v669
      %672 = vmin.xlane.f32.xlu0 %v671
      %v673 = vpop.xlane.xlu0 %672
      %vm674 = vcmp.eq.f32.partialorder %v671, %v673
      %v675 = vsel %vm674, %v670, inf
      %676 = vmin.xlane.f32.xlu0 %v675
      %v677 = vpop.xlane.xlu0 %676
      %v678 = vcvt.f32.s32 %v677
      %v679 = vcvt.f32.s32 %v673
      %v680 = vshll.u32 %v679, 16
      %v681 = vadd.s32 %v680, %v678
      %v682 = vand.u32 %v601, 65535
      %v683 = vshra.s32 %v601, 16
      %v684 = vcvt.s32.f32 %v682
      %v685 = vcvt.s32.f32 %v683
      %686 = vmin.xlane.f32.xlu0 %v685
      %v687 = vpop.xlane.xlu0 %686
      %vm688 = vcmp.eq.f32.partialorder %v685, %v687
      %v689 = vsel %vm688, %v684, inf
      %690 = vmin.xlane.f32.xlu0 %v689
      %v691 = vpop.xlane.xlu0 %690
      %v692 = vcvt.f32.s32 %v691
      %v693 = vcvt.f32.s32 %v687
      %v694 = vshll.u32 %v693, 16
      %v695 = vadd.s32 %v694, %v692
      %v696 = vand.u32 %v602, 65535
      %v697 = vshra.s32 %v602, 16
      %v698 = vcvt.s32.f32 %v696
      %v699 = vcvt.s32.f32 %v697
      %700 = vmin.xlane.f32.xlu0 %v699
      %v701 = vpop.xlane.xlu0 %700
      %vm702 = vcmp.eq.f32.partialorder %v699, %v701
      %v703 = vsel %vm702, %v698, inf
      %704 = vmin.xlane.f32.xlu0 %v703
      %v705 = vpop.xlane.xlu0 %704
      %v706 = vcvt.f32.s32 %v705
      %v707 = vcvt.f32.s32 %v701
      %v708 = vshll.u32 %v707, 16
      %v709 = vadd.s32 %v708, %v706
      %v710 = vand.u32 %v603, 65535
      %v711 = vshra.s32 %v603, 16
      %v712 = vcvt.s32.f32 %v710
      %v713 = vcvt.s32.f32 %v711
      %714 = vmin.xlane.f32.xlu0 %v713
      %v715 = vpop.xlane.xlu0 %714
      %vm716 = vcmp.eq.f32.partialorder %v713, %v715
      %v717 = vsel %vm716, %v712, inf
      %718 = vmin.xlane.f32.xlu0 %v717
      %v719 = vpop.xlane.xlu0 %718
      %v720 = vcvt.f32.s32 %v719
      %v721 = vcvt.f32.s32 %v715
      %v722 = vshll.u32 %v721, 16
      %v723 = vadd.s32 %v722, %v720
      %v724 = vand.u32 %v604, 65535
      %v725 = vshra.s32 %v604, 16
      %v726 = vcvt.s32.f32 %v724
      %v727 = vcvt.s32.f32 %v725
      %728 = vmin.xlane.f32.xlu0 %v727
      %v729 = vpop.xlane.xlu0 %728
      %vm730 = vcmp.eq.f32.partialorder %v727, %v729
      %v731 = vsel %vm730, %v726, inf
      %732 = vmin.xlane.f32.xlu0 %v731
      %v733 = vpop.xlane.xlu0 %732
      %v734 = vcvt.f32.s32 %v733
      %v735 = vcvt.f32.s32 %v729
      %v736 = vshll.u32 %v735, 16
      %v737 = vadd.s32 %v736, %v734
      %v738 = vand.u32 %v605, 65535
      %v739 = vshra.s32 %v605, 16
      %v740 = vcvt.s32.f32 %v738
      %v741 = vcvt.s32.f32 %v739
      %742 = vmin.xlane.f32.xlu0 %v741
      %v743 = vpop.xlane.xlu0 %742
      %vm744 = vcmp.eq.f32.partialorder %v741, %v743
      %v745 = vsel %vm744, %v740, inf
      %746 = vmin.xlane.f32.xlu0 %v745
      %v747 = vpop.xlane.xlu0 %746
      %v748 = vcvt.f32.s32 %v747
      %v749 = vcvt.f32.s32 %v743
      %v750 = vshll.u32 %v749, 16
      %v751 = vadd.s32 %v750, %v748
      %v752 = vand.u32 %v606, 65535
      %v753 = vshra.s32 %v606, 16
      %v754 = vcvt.s32.f32 %v752
      %v755 = vcvt.s32.f32 %v753
      %756 = vmin.xlane.f32.xlu0 %v755
      %v757 = vpop.xlane.xlu0 %756
      %vm758 = vcmp.eq.f32.partialorder %v755, %v757
      %v759 = vsel %vm758, %v754, inf
      %760 = vmin.xlane.f32.xlu0 %v759
      %v761 = vpop.xlane.xlu0 %760
      %v762 = vcvt.f32.s32 %v761
      %v763 = vcvt.f32.s32 %v757
      %v764 = vshll.u32 %v763, 16
      %v765 = vadd.s32 %v764, %v762
      %v766 = vand.u32 %v607, 65535
      %v767 = vshra.s32 %v607, 16
      %v768 = vcvt.s32.f32 %v766
      %v769 = vcvt.s32.f32 %v767
      %770 = vmin.xlane.f32.xlu0 %v769
      %v771 = vpop.xlane.xlu0 %770
      %vm772 = vcmp.eq.f32.partialorder %v769, %v771
      %v773 = vsel %vm772, %v768, inf
      %774 = vmin.xlane.f32.xlu0 %v773
      %v775 = vpop.xlane.xlu0 %774
      %v776 = vcvt.f32.s32 %v775
      %v777 = vcvt.f32.s32 %v771
      %v778 = vshll.u32 %v777, 16
      %v779 = vadd.s32 %v778, %v776
      %v780 = vand.u32 %v608, 65535
      %v781 = vshra.s32 %v608, 16
      %v782 = vcvt.s32.f32 %v780
      %v783 = vcvt.s32.f32 %v781
      %784 = vmin.xlane.f32.xlu0 %v783
      %v785 = vpop.xlane.xlu0 %784
      %vm786 = vcmp.eq.f32.partialorder %v783, %v785
      %v787 = vsel %vm786, %v782, inf
      %788 = vmin.xlane.f32.xlu0 %v787
      %v789 = vpop.xlane.xlu0 %788
      %v790 = vcvt.f32.s32 %v789
      %v791 = vcvt.f32.s32 %v785
      %v792 = vshll.u32 %v791, 16
      %v793 = vadd.s32 %v792, %v790
      %v794 = vand.u32 %v609, 65535
      %v795 = vshra.s32 %v609, 16
      %v796 = vcvt.s32.f32 %v794
      %v797 = vcvt.s32.f32 %v795
      %798 = vmin.xlane.f32.xlu0 %v797
      %v799 = vpop.xlane.xlu0 %798
      %vm800 = vcmp.eq.f32.partialorder %v797, %v799
      %v801 = vsel %vm800, %v796, inf
      %802 = vmin.xlane.f32.xlu0 %v801
      %v803 = vpop.xlane.xlu0 %802
      %v804 = vcvt.f32.s32 %v803
      %v805 = vcvt.f32.s32 %v799
      %v806 = vshll.u32 %v805, 16
      %v807 = vadd.s32 %v806, %v804
      %v808 = vand.u32 %v610, 65535
      %v809 = vshra.s32 %v610, 16
      %v810 = vcvt.s32.f32 %v808
      %v811 = vcvt.s32.f32 %v809
      %812 = vmin.xlane.f32.xlu0 %v811
      %v813 = vpop.xlane.xlu0 %812
      %vm814 = vcmp.eq.f32.partialorder %v811, %v813
      %v815 = vsel %vm814, %v810, inf
      %816 = vmin.xlane.f32.xlu0 %v815
      %v817 = vpop.xlane.xlu0 %816
      %v818 = vcvt.f32.s32 %v817
      %v819 = vcvt.f32.s32 %v813
      %v820 = vshll.u32 %v819, 16
      %v821 = vadd.s32 %v820, %v818
      %v822 = vand.u32 %v611, 65535
      %v823 = vshra.s32 %v611, 16
      %v824 = vcvt.s32.f32 %v822
      %v825 = vcvt.s32.f32 %v823
      %826 = vmin.xlane.f32.xlu0 %v825
      %v827 = vpop.xlane.xlu0 %826
      %vm828 = vcmp.eq.f32.partialorder %v825, %v827
      %v829 = vsel %vm828, %v824, inf
      %830 = vmin.xlane.f32.xlu0 %v829
      %v831 = vpop.xlane.xlu0 %830
      %v832 = vcvt.f32.s32 %v831
      %v833 = vcvt.f32.s32 %v827
      %v834 = vshll.u32 %v833, 16
      %v835 = vadd.s32 %v834, %v832
      %vm836 = vcmask 7168
      %837 = vst.msk [vmem:[%s145] sm:$0xff] %vm836, %v625
      %838 = vst.msk [vmem:[%s145 + $0x8] sm:$0xff] %vm836, %v639
      %839 = vst.msk [vmem:[%s145 + $0x10] sm:$0xff] %vm836, %v653
      %840 = vst.msk [vmem:[%s145 + $0x18] sm:$0xff] %vm836, %v667
      %841 = vst.msk [vmem:[%s145 + $0x20] sm:$0xff] %vm836, %v681
      %842 = vst.msk [vmem:[%s145 + $0x28] sm:$0xff] %vm836, %v695
      %843 = vst.msk [vmem:[%s145 + $0x30] sm:$0xff] %vm836, %v709
      %844 = vst.msk [vmem:[%s145 + $0x38] sm:$0xff] %vm836, %v723
      %845 = vst.msk [vmem:[%s145 + $0x40] sm:$0xff] %vm836, %v737
      %846 = vst.msk [vmem:[%s145 + $0x48] sm:$0xff] %vm836, %v751
      %847 = vst.msk [vmem:[%s145 + $0x50] sm:$0xff] %vm836, %v765
      %848 = vst.msk [vmem:[%s145 + $0x58] sm:$0xff] %vm836, %v779
      %849 = vst.msk [vmem:[%s145 + $0x60] sm:$0xff] %vm836, %v793
      %850 = vst.msk [vmem:[%s145 + $0x68] sm:$0xff] %vm836, %v807
      %851 = vst.msk [vmem:[%s145 + $0x70] sm:$0xff] %vm836, %v821
      %852 = vst.msk [vmem:[%s145 + $0x78] sm:$0xff] %vm836, %v835
      %s853 = smul.u32 16, %s13
      %p854 = scmp.lt.s32.totalorder %s853, 31
      %s855 = scalar_select %p854, %s853, 31
      %s856 = smul.addr %s855, 8
      %s857 = scalar_lea.vmem %s2, %s856
      // Predicated region
      $region29: #{tpu_custom_call.1} parent=27 // pred_check
        %p858 = pneg %p78
      $region30: #{tpu_custom_call.1} parent=27 // pred_check_branch
        %860 = sbr.rel (%p858) target = $region32
      $region31: #{tpu_custom_call.1} parent=27 // pred_region
        %s861 = smul.u32 16, %s13
      $region32: #{tpu_custom_call.1} parent=27 // pred_fallthru
        _
    $region28: #{tpu_custom_call.1} parent=5 // pred_fallthru
      _
    %p862 = scmp.le.s32.totalorder 2, %s8
    // Predicated region
    $region33: #{tpu_custom_call.1} parent=5 // pred_check
      %p863 = pneg %p862
    $region34: #{tpu_custom_call.1} parent=5 // pred_check_branch
      %865 = sbr.rel (%p863) target = $region36
    $region35: #{tpu_custom_call.1} parent=5 // pred_region
      %s866 = ssub.s32 %s8, 2
      // Predicated region
      $region37: #{tpu_custom_call.1} parent=35 // pred_check
        %p867 = pneg %p84
      $region38: #{tpu_custom_call.1} parent=35 // pred_check_branch
        %869 = sbr.rel (%p867) target = $region40
      $region39: #{tpu_custom_call.1} parent=35 // pred_region
        %s870 = smul.u32 16, %s14
        %p871 = scmp.lt.s32.totalorder %s870, 31
        %s872 = scalar_select %p871, %s870, 31
        %s873 = smul.addr %s872, 8
        %s874 = scalar_lea.vmem %s2, %s873
      $region40: #{tpu_custom_call.1} parent=35 // pred_fallthru
        _
    $region36: #{tpu_custom_call.1} parent=5 // pred_fallthru
      _
  $region6: #{tpu_custom_call.1} parent=0 // loop_footer
    %s12 = sadd.s32 1, %s8
  $region7: #{tpu_custom_call.1} parent=0 // loop_footer_branch
    %7 = sbr.rel target = $region3
  $region8: #{tpu_custom_call.1} parent=0 // loop_exit
    _

</llo_original>
